<compile_context>
chip_gen: v6e
topology: v6e:2x2x1
jax: 0.10.0
libtpu: 0.0.40
codegen_flags: <defaults>
</compile_context>

<pallas_src>
import functools

import jax
import jax.numpy as jnp
from jax.experimental import pallas as pl
from jax.experimental.pallas import tpu as pltpu

_HALO = 128  # lane-aligned halo block width; covers 'same' padding for K <= 257


def _cdiv(a, b):
    return -(-a // b)


def _vmem_capacity_bytes():
    """Best-effort VMEM capacity query; falls back to 128 MiB (v5e/v6e)."""
    try:
        info = pltpu.get_tpu_info()
        cap = getattr(info, "vmem_capacity_bytes", None)
        if cap:
            return int(cap)
    except Exception:
        pass
    return 128 * 1024 * 1024


def _conv_layer_kernel(*refs, K, pad, tile_l, L, Cin, Cout, use_bias, use_norm,
                       use_act, eps, has_halo, mask_x):
    """One (batch, length-tile) grid step.

    refs (in order): x (Cin, tile_l), [lh (Cin,128), rh (Cin,128)],
                     w (K, Cout, Cin), [b (Cout, 1)], out (Cout, tile_l)
    """
    i = 0
    x_ref = refs[i]; i += 1
    if has_halo:
        lh_ref = refs[i]
        rh_ref = refs[i + 1]
        i += 2
    w_ref = refs[i]; i += 1
    if use_bias:
        b_ref = refs[i]; i += 1
    o_ref = refs[i]

    j = pl.program_id(1)
    t0 = j * tile_l

    x = x_ref[...]                                  # (Cin, tile_l), input dtype
    zero = jnp.zeros((), x.dtype)
    if mask_x:
        # Last tile may overhang the true length L: zero the unspecified lanes
        # (they would otherwise leak into valid output columns via s>0 taps).
        col_t = jax.lax.broadcasted_iota(jnp.int32, (1, tile_l), 1)
        x = jnp.where(col_t < (L - t0), x, zero)

    w = w_ref[...]                                  # (K, Cout, Cin), tiny

    # Center tap: no shift, no mask.
    acc = jnp.dot(w[pad], x, preferred_element_type=jnp.float32)  # (Cout, tile_l)

    if has_halo:
        col_h = jax.lax.broadcasted_iota(jnp.int32, (1, _HALO), 1)
        # Left halo: previous tile's last 128 cols; invalid (left 'same' pad) for
        # the first tile.  Right halo: next tile's first 128 cols; invalid beyond
        # the true length L.  Both use select (NaN-safe) on an iota mask.
        lh = jnp.where(col_h >= (_HALO - t0), lh_ref[...], zero)
        rh = jnp.where(col_h < (L - t0 - tile_l), rh_ref[...], zero)
        head = jnp.zeros((Cout, _HALO), jnp.float32)   # fix-up for first 128 cols
        tail = jnp.zeros((Cout, _HALO), jnp.float32)   # fix-up for last 128 cols

    # Remaining taps: per-tap MXU accumulation (MXU has plenty of slack here;
    # this avoids any (K*Cin, tile_l) / (Cin, tile_l+halo) materialization).
    for k in range(K):
        s = k - pad
        if s == 0:
            continue
        wk = w[k]                                   # (Cout, Cin)
        if abs(s) < tile_l:                         # in-tile part of the tap
            if s > 0:
                tap = jnp.concatenate(
                    [x[:, s:], jnp.zeros((Cin, s), x.dtype)], axis=1)
            else:
                m = -s
                tap = jnp.concatenate(
                    [jnp.zeros((Cin, m), x.dtype), x[:, :tile_l - m]], axis=1)
            acc = acc + jnp.dot(wk, tap, preferred_element_type=jnp.float32)
        if has_halo:
            if s > 0:
                rtap = jnp.concatenate(
                    [jnp.zeros((Cin, _HALO - s), x.dtype), rh[:, :s]], axis=1)
                tail = tail + jnp.dot(wk, rtap,
                                      preferred_element_type=jnp.float32)
            else:
                m = -s
                ltap = jnp.concatenate(
                    [lh[:, _HALO - m:], jnp.zeros((Cin, _HALO - m), x.dtype)],
                    axis=1)
                head = head + jnp.dot(wk, ltap,
                                      preferred_element_type=jnp.float32)

    if use_bias:
        b = b_ref[...].astype(jnp.float32)          # (Cout, 1)

    def finalize(v):
        if use_bias:
            v = v + b
        if use_norm:
            # nn.RMSNorm(out_dim, elementwise_affine=False) over the trailing
            # axis (requires L == out_dim; single length tile, no padding cols).
            ms = jnp.mean(v * v, axis=-1, keepdims=True)
            v = v * jax.lax.rsqrt(ms + eps)
        if use_act:
            v = v * jax.nn.sigmoid(v)               # SiLU
        return v.astype(o_ref.dtype)

    if not has_halo:
        o_ref[...] = finalize(acc)
    elif tile_l == _HALO:
        o_ref[...] = finalize(acc + head + tail)
    else:
        o_ref[...] = finalize(acc)
        o_ref[:, :_HALO] = finalize(acc[:, :_HALO] + head)
        o_ref[:, tile_l - _HALO:] = finalize(acc[:, tile_l - _HALO:] + tail)


@functools.partial(jax.jit, static_argnames=("norm", "act", "eps", "max_tile_l"))
def conv_layer_forward(x, weight, bias=None, *, norm=False, act=False, eps=None,
                       max_tile_l=65536):
    """ConvLayer forward. x: (B, Cin, L), weight: (Cout, Cin, K) K odd,
    bias: (Cout,) or None.  stride=dilation=groups=1 (module defaults)."""
    B, Cin, L = x.shape
    Cout, Cin_w, K = weight.shape
    if Cin != Cin_w:
        raise ValueError("in_dim mismatch between x and weight")
    if K % 2 != 1:
        raise ValueError(f"kernel size {K} should be odd number")
    pad = K // 2
    if pad > _HALO:
        raise ValueError("kernel_size too large for the 128-wide halo")
    if norm and L != Cout:
        # nn.RMSNorm(out_dim) normalizes the trailing axis of the conv output,
        # which PyTorch only accepts when that axis has size out_dim.
        raise ValueError("norm=True requires the sequence length to equal out_dim")

    if eps is None:
        eps = float(jnp.finfo(x.dtype).eps)   # PyTorch RMSNorm(eps=None) default
    dbytes = x.dtype.itemsize

    # ---- generation-aware length tiling -----------------------------------
    vmem_cap = _vmem_capacity_bytes()
    budget = max(vmem_cap // 8, 4 * 1024 * 1024)         # per-step working set
    # bytes per output column: double-buffered x/out blocks, (K-1) shifted tap
    # copies (input dtype) and the f32 accumulator / epilogue value.
    per_col = (2 * dbytes * (Cin + Cout) + dbytes * Cin * max(K - 1, 1)
               + 4 * 2 * Cout)
    tile_l = budget // max(per_col, 1)
    tile_l = max(_HALO, min(tile_l, int(max_tile_l)))
    tile_l = (tile_l // _HALO) * _HALO

    if norm or tile_l >= L:
        tile_l, n_l = L, 1                # single tile == full array dim
    else:
        n_l = _cdiv(L, tile_l)
    has_halo = (n_l > 1) and (pad > 0)
    mask_x = (L % tile_l) != 0

    use_bias = bias is not None
    wk = jnp.transpose(weight, (2, 0, 1))                 # (K, Cout, Cin)

    kernel = functools.partial(
        _conv_layer_kernel, K=K, pad=pad, tile_l=tile_l, L=L, Cin=Cin, Cout=Cout,
        use_bias=use_bias, use_norm=norm, use_act=act, eps=eps,
        has_halo=has_halo, mask_x=mask_x)

    bp = tile_l // _HALO if has_halo else 1
    n128 = _cdiv(L, _HALO)

    in_specs = [pl.BlockSpec((None, Cin, tile_l), lambda b, j: (b, 0, j))]
    args = [x]
    if has_halo:
        # Left halo = previous tile's last 128 cols (clamped at the left edge),
        # right halo = next tile's first 128 cols (clamped at the right edge);
        # invalid columns are masked inside the kernel, so no jnp.pad copy of x.
        in_specs.append(pl.BlockSpec(
            (None, Cin, _HALO),
            lambda b, j: (b, 0, jnp.maximum(j * bp - 1, 0))))
        in_specs.append(pl.BlockSpec(
            (None, Cin, _HALO),
            lambda b, j: (b, 0, jnp.minimum((j + 1) * bp, n128 - 1))))
        args += [x, x]
    # Weight (and bias): tiny constant-index blocks -> resident in VMEM.
    in_specs.append(pl.BlockSpec((K, Cout, Cin), lambda b, j: (0, 0, 0)))
    args.append(wk)
    if use_bias:
        in_specs.append(pl.BlockSpec((Cout, 1), lambda b, j: (0, 0)))
        args.append(bias.reshape(Cout, 1))

    vmem_limit = int(min(max(vmem_cap // 2, 32 * 1024 * 1024), 64 * 1024 * 1024))

    cost = pl.CostEstimate(
        flops=2 * B * L * Cout * K * Cin,
        transcendentals=(B * L * Cout) if (act or norm) else 0,
        bytes_accessed=dbytes * B * L * (Cin + Cout)
        + dbytes * (K * Cin * Cout + Cout))

    out = pl.pallas_call(
        kernel,
        out_shape=jax.ShapeDtypeStruct((B, Cout, L), x.dtype),
        grid=(B, n_l),
        in_specs=in_specs,
        out_specs=pl.BlockSpec((None, Cout, tile_l), lambda b, j: (b, 0, j)),
        compiler_params=pltpu.CompilerParams(
            dimension_semantics=("parallel", "parallel"),
            vmem_limit_bytes=vmem_limit),
        cost_estimate=cost,
    )(*args)
    return out


def _reference(x, weight, bias, *, norm, act):
    out = jax.lax.conv_general_dilated(
        x, weight, window_strides=(1,), padding=[(weight.shape[-1] // 2,) * 2],
        dimension_numbers=("NCH", "OIH", "NCH"))
    if bias is not None:
        out = out + bias[None, :, None]
    if norm:
        ms = jnp.mean(out * out, axis=-1, keepdims=True)
        out = out * jax.lax.rsqrt(ms + jnp.finfo(x.dtype).eps)
    if act:
        out = out * jax.nn.sigmoid(out)
    return out


if __name__ == "__main__":
    key = jax.random.PRNGKey(0)
    kx, kw, kb, kx2, kx3, kw5, kb5, kx4 = jax.random.split(key, 8)

    # ConvLayer(in_dim=4, out_dim=8, kernel_size=3, use_bias=True, act='silu')
    B, Cin, Cout, K = 2, 4, 8, 3
    weight = jax.random.normal(kw, (Cout, Cin, K), jnp.float32) * 0.1
    bias = jax.random.normal(kb, (Cout,), jnp.float32) * 0.1

    # 1) small single-tile shape, bias + SiLU
    x = jax.random.normal(kx, (B, Cin, 16), jnp.float32)
    out = jax.block_until_ready(
        conv_layer_forward(x, weight, bias, norm=False, act=True))
    ref = _reference(x, weight, bias, norm=False, act=True)
    assert out.shape == ref.shape
    assert jnp.allclose(out, ref, atol=2e-5, rtol=2e-5), "mismatch (bias+silu)"

    # 2) multi-tile length axis, L not a multiple of the tile (exercises halos,
    #    clamped edge blocks and the boundary mask), no bias/act
    x2 = jax.random.normal(kx2, (B, Cin, 300), jnp.float32)
    out2 = jax.block_until_ready(
        conv_layer_forward(x2, weight, None, norm=False, act=False,
                           max_tile_l=128))
    ref2 = _reference(x2, weight, None, norm=False, act=False)
    assert out2.shape == ref2.shape
    assert jnp.allclose(out2, ref2, atol=2e-5, rtol=2e-5), "mismatch (tiled)"

    # 3) RMSNorm + SiLU path (L == out_dim, as nn.RMSNorm(out_dim) requires)
    x3 = jax.random.normal(kx3, (B, Cin, Cout), jnp.float32)
    out3 = jax.block_until_ready(
        conv_layer_forward(x3, weight, bias, norm=True, act=True))
    ref3 = _reference(x3, weight, bias, norm=True, act=True)
    assert out3.shape == ref3.shape
    assert jnp.allclose(out3, ref3, atol=2e-5, rtol=2e-5), "mismatch (norm+silu)"

    # 4) kernel_size=5, multi-tile, L a multiple of the tile, bias + SiLU
    w5 = jax.random.normal(kw5, (Cout, Cin, 5), jnp.float32) * 0.1
    b5 = jax.random.normal(kb5, (Cout,), jnp.float32) * 0.1
    x4 = jax.random.normal(kx4, (B, Cin, 512), jnp.float32)
    out4 = jax.block_until_ready(
        conv_layer_forward(x4, w5, b5, norm=False, act=True, max_tile_l=128))
    ref4 = _reference(x4, w5, b5, norm=False, act=True)
    assert out4.shape == ref4.shape
    assert jnp.allclose(out4, ref4, atol=2e-5, rtol=2e-5), "mismatch (k5 tiled)"

    print("KERNEL_OK")
</pallas_src>

<mosaic_0001>
module attributes {stable_mosaic.version = 11 : i64} {
  func.func @_conv_layer_kernel(%arg0: i32, %arg1: i32, %arg2: memref<1x4x16xf32, #tpu.memory_space<vmem>>, %arg3: memref<3x8x4xf32, #tpu.memory_space<vmem>>, %arg4: memref<8x1xf32, #tpu.memory_space<vmem>>, %arg5: memref<1x8x16xf32, #tpu.memory_space<vmem>>) attributes {dimension_semantics = [#tpu.dimension_semantics<parallel>, #tpu.dimension_semantics<parallel>], iteration_bounds = array<i64: 2, 1>, scalar_prefetch = 0 : i64, scratch_operands = 0 : i64, tpu.core_type = #tpu.core_type<tc>, window_params = [{transform_indices = @transform_0, window_bounds = array<i64: 1, 4, 16>}, {pipeline_mode = #tpu.pipeline_mode<synchronous>, transform_indices = @transform_1, window_bounds = array<i64: 3, 8, 4>}, {pipeline_mode = #tpu.pipeline_mode<synchronous>, transform_indices = @transform_2, window_bounds = array<i64: 8, 1>}, {transform_indices = @transform_3, window_bounds = array<i64: 1, 8, 16>}]} {
    %c0 = arith.constant 0 : index
    %c0_0 = arith.constant 0 : index
    %c0_1 = arith.constant 0 : index
    %0 = vector.load %arg2[%c0, %c0_0, %c0_1] : memref<1x4x16xf32, #tpu.memory_space<vmem>>, vector<1x4x16xf32>
    %1 = vector.shape_cast %0 : vector<1x4x16xf32> to vector<4x16xf32>
    %c0_2 = arith.constant 0 : index
    %c0_3 = arith.constant 0 : index
    %c0_4 = arith.constant 0 : index
    %2 = vector.load %arg3[%c0_2, %c0_3, %c0_4] : memref<3x8x4xf32, #tpu.memory_space<vmem>>, vector<3x8x4xf32>
    %3 = vector.extract_strided_slice %2 {offsets = [1, 0, 0], sizes = [1, 8, 4], strides = [1, 1, 1]} : vector<3x8x4xf32> to vector<1x8x4xf32>
    %4 = vector.shape_cast %3 : vector<1x8x4xf32> to vector<8x4xf32>
    %cst = arith.constant dense<0.000000e+00> : vector<8x16xf32>
    %5 = tpu.matmul %4, %1, %cst {dimension_numbers = #tpu.dot_dimension_numbers<[1], [0], [0], [1], [0, 0, 1, 1], [], []>} : vector<8x4xf32>, vector<4x16xf32>, vector<8x16xf32> -> vector<8x16xf32>
    %6 = vector.extract_strided_slice %2 {offsets = [0, 0, 0], sizes = [1, 8, 4], strides = [1, 1, 1]} : vector<3x8x4xf32> to vector<1x8x4xf32>
    %7 = vector.shape_cast %6 : vector<1x8x4xf32> to vector<8x4xf32>
    %cst_5 = arith.constant 0.000000e+00 : f32
    %8 = vector.broadcast %cst_5 : f32 to vector<4x1xf32>
    %9 = vector.extract_strided_slice %1 {offsets = [0, 0], sizes = [4, 15], strides = [1, 1]} : vector<4x16xf32> to vector<4x15xf32>
    %10 = tpu.concatenate %8, %9 in 1 : vector<4x1xf32>, vector<4x15xf32> -> vector<4x16xf32>
    %cst_6 = arith.constant dense<0.000000e+00> : vector<8x16xf32>
    %11 = tpu.matmul %7, %10, %cst_6 {dimension_numbers = #tpu.dot_dimension_numbers<[1], [0], [0], [1], [0, 0, 1, 1], [], []>} : vector<8x4xf32>, vector<4x16xf32>, vector<8x16xf32> -> vector<8x16xf32>
    %12 = arith.addf %5, %11 : vector<8x16xf32>
    %13 = vector.extract_strided_slice %2 {offsets = [2, 0, 0], sizes = [1, 8, 4], strides = [1, 1, 1]} : vector<3x8x4xf32> to vector<1x8x4xf32>
    %14 = vector.shape_cast %13 : vector<1x8x4xf32> to vector<8x4xf32>
    %15 = vector.extract_strided_slice %1 {offsets = [0, 1], sizes = [4, 15], strides = [1, 1]} : vector<4x16xf32> to vector<4x15xf32>
    %cst_7 = arith.constant 0.000000e+00 : f32
    %16 = vector.broadcast %cst_7 : f32 to vector<4x1xf32>
    %17 = tpu.concatenate %15, %16 in 1 : vector<4x15xf32>, vector<4x1xf32> -> vector<4x16xf32>
    %cst_8 = arith.constant dense<0.000000e+00> : vector<8x16xf32>
    %18 = tpu.matmul %14, %17, %cst_8 {dimension_numbers = #tpu.dot_dimension_numbers<[1], [0], [0], [1], [0, 0, 1, 1], [], []>} : vector<8x4xf32>, vector<4x16xf32>, vector<8x16xf32> -> vector<8x16xf32>
    %19 = arith.addf %12, %18 : vector<8x16xf32>
    %c0_9 = arith.constant 0 : index
    %c0_10 = arith.constant 0 : index
    %20 = vector.load %arg4[%c0_9, %c0_10] : memref<8x1xf32, #tpu.memory_space<vmem>>, vector<8x1xf32>
    %21 = vector.broadcast %20 : vector<8x1xf32> to vector<8x16xf32>
    %22 = arith.addf %19, %21 : vector<8x16xf32>
    %23 = arith.negf %22 : vector<8x16xf32>
    %24 = math.exp %23 : vector<8x16xf32>
    %cst_11 = arith.constant 1.000000e+00 : f32
    %25 = vector.broadcast %cst_11 : f32 to vector<8x16xf32>
    %26 = arith.addf %25, %24 : vector<8x16xf32>
    %27 = arith.divf %25, %26 : vector<8x16xf32>
    %28 = arith.mulf %22, %27 : vector<8x16xf32>
    %c0_12 = arith.constant 0 : index
    %c0_13 = arith.constant 0 : index
    %c0_14 = arith.constant 0 : index
    %29 = vector.load %arg5[%c0_12, %c0_13, %c0_14] : memref<1x8x16xf32, #tpu.memory_space<vmem>>, vector<1x8x16xf32>
    %30 = vector.shape_cast %29 : vector<1x8x16xf32> to vector<8x16xf32>
    %31 = vector.shape_cast %28 : vector<8x16xf32> to vector<1x8x16xf32>
    tpu.vector_store %arg5[%c0_12, %c0_13, %c0_14], %31 {strides = array<i32>} : memref<1x8x16xf32, #tpu.memory_space<vmem>>, vector<1x8x16xf32>,
    return
  }
  func.func @transform_0(%arg0: i32, %arg1: i32) -> (i32, i32, i32) {
    %c0_i32 = arith.constant 0 : i32
    %c0_i32_0 = arith.constant 0 : i32
    return %arg0, %c0_i32, %arg1 : i32, i32, i32
  }
  func.func @transform_1(%arg0: i32, %arg1: i32) -> (i32, i32, i32) {
    %c0_i32 = arith.constant 0 : i32
    %c0_i32_0 = arith.constant 0 : i32
    %c0_i32_1 = arith.constant 0 : i32
    %c0_i32_2 = arith.constant 0 : i32
    return %c0_i32, %c0_i32_0, %c0_i32_1 : i32, i32, i32
  }
  func.func @transform_2(%arg0: i32, %arg1: i32) -> (i32, i32) {
    %c0_i32 = arith.constant 0 : i32
    %c0_i32_0 = arith.constant 0 : i32
    %c0_i32_1 = arith.constant 0 : i32
    return %c0_i32, %c0_i32_0 : i32, i32
  }
  func.func @transform_3(%arg0: i32, %arg1: i32) -> (i32, i32, i32) {
    %c0_i32 = arith.constant 0 : i32
    %c0_i32_0 = arith.constant 0 : i32
    return %arg0, %c0_i32, %arg1 : i32, i32, i32
  }
}

</mosaic_0001>

<llo_original>
// kernel: conv_layer_forward.1
$region0: #{conv_layer_forward.1}
  #allocation0 [shape = 'u32[]', space=smem, size = 0x4, offset = 0x4, fixed_abs, tag = 'smem constant byte address 0x4 - core index']
  #allocation1 [shape = 'u32[144,128]{1,0:T(1,128)}', space=vmem, size = 0x12000, scoped, tag = 'internal scratch']
  %s0 = inlined_call_operand.vmem [shape: f32[2,4,16], index: 0, kind: input, shape index: {}]
  %s1 = inlined_call_operand.vmem [shape: f32[3,8,4], index: 1, kind: input, shape index: {}]
  %s2 = inlined_call_operand.vmem [shape: f32[8,1], index: 2, kind: input, shape index: {}]
  %s3 = inlined_call_operand.hbm [shape: f32[2,8,16], index: 3, kind: output, shape index: {}]
  %s4 = sld [smem:[#allocation0]]
  $region45: #{conv_layer_forward.1} parent=0
    _
  %s6 = ssub.s32 1, %s4
  %s7 = scalar_select 0, %s6, %s4
  $region1: #{conv_layer_forward.1} parent=0
    #allocation2 [shape = 'u8[8192]{0}', space=vmem, size = 0x2000, scoped, tag = 'output window, operand 0']
    #allocation3 [shape = 's32[2]{0}', space=sflag, size = 0x8, scoped, tag = 'scoped memory for conv_layer_forward.1']
    %8 = vsyncpa [#allocation3], 0
    %s9 = scalar_lea.sflag [#allocation3], 1
    %10 = vsyncpa %s9, 0
    loop: start=0, step=1, limit=4
    $region2: #{conv_layer_forward.1} parent=1 // loop_pre_header
      _
    $region3: #{conv_layer_forward.1} parent=1 // loop_header
      %s12 = sphi 0, %s16
      %p13 = scmp.ge.s32.totalorder %s12, 4
      %s19 = sphi 0, %s31
      %s20 = sphi 0, %s27
      %s21 = sphi 0, %s19
      %s22 = sphi 0, %s20
      %s23 = sphi 0, %s21
      %s24 = sphi 0, %s22
      %s36 = sphi 0, %s38
      %s39 = sphi 0, %s36
      %s40 = sphi 0, %s39
      %s56 = sphi 0, %s40
      %s60 = sphi 0, %s60
      %s62 = sphi 0, %s60
      %s63 = sphi 0, %s62
      %s77 = sphi 0, %s63
      %s81 = sphi 0, %s81
      %s83 = sphi 0, %s81
      %s84 = sphi 0, %s83
      %s98 = sphi 0, %s84
      %s106 = sphi 0, %s108
      %s109 = sphi 0, %s106
      %s110 = sphi 0, %s109
      %s126 = sphi 0, %s110
    $region4: #{conv_layer_forward.1} parent=1 // loop_header_branch
      %15 = sbr.rel (%p13) target = $region8
    $region5: #{conv_layer_forward.1} parent=1 // loop_body
      %s17 = ssub.s32 %s12, 1
      %s18 = ssub.s32 %s12, 2
      %s25 = sadd.s32 1, %s20
      %p26 = scmp.ge.s32.totalorder %s25, 1
      %s27 = scalar_select %p26, 0, %s25
      %s28 = sadd.s32 1, %s19
      %s29 = scalar_select %p26, %s28, %s19
      %p30 = scmp.ge.s32.totalorder %s29, 2
      %s31 = scalar_select %p30, 0, %s29
      %s32 = ssub.s32 %s19, %s31
      %s33 = ssub.s32 %s20, %s27
      %s34 = sor.u32 %s32, %s33
      %p35 = scmp.eq.s32.totalorder %s34, 0
      %s37 = sadd.s32 %s36, 1
      %s38 = scalar_select %p35, %s36, %s37
      %p41 = pneg %p35
      %p42 = scmp.eq.s32.totalorder %s12, 1
      %p43 = por %p41, %p42
      %p44 = scmp.ne.s32.totalorder %s36, %s39
      %p45 = scmp.eq.s32.totalorder %s12, 0
      %p46 = por %p44, %p45
      %p47 = scmp.ne.s32.totalorder %s36, %s39
      %p48 = scmp.eq.s32.totalorder %s17, 1
      %p49 = por %p47, %p48
      %p50 = scmp.ne.s32.totalorder %s39, %s40
      %p51 = scmp.eq.s32.totalorder %s17, 0
      %p52 = por %p50, %p51
      %p53 = scmp.ne.s32.totalorder %s39, %s40
      %p54 = scmp.eq.s32.totalorder %s18, 1
      %p55 = por %p53, %p54
      %p57 = scmp.ne.s32.totalorder %s40, %s56
      %p58 = scmp.eq.s32.totalorder %s18, 0
      %p59 = por %p57, %p58
      %s61 = sadd.s32 %s60, 1
      %p64 = scmp.eq.s32.totalorder %s12, 1
      %p65 = scmp.ne.s32.totalorder %s60, %s62
      %p66 = scmp.eq.s32.totalorder %s12, 0
      %p67 = por %p65, %p66
      %p68 = scmp.ne.s32.totalorder %s60, %s62
      %p69 = scmp.eq.s32.totalorder %s17, 1
      %p70 = por %p68, %p69
      %p71 = scmp.ne.s32.totalorder %s62, %s63
      %p72 = scmp.eq.s32.totalorder %s17, 0
      %p73 = por %p71, %p72
      %p74 = scmp.ne.s32.totalorder %s62, %s63
      %p75 = scmp.eq.s32.totalorder %s18, 1
      %p76 = por %p74, %p75
      %p78 = scmp.ne.s32.totalorder %s63, %s77
      %p79 = scmp.eq.s32.totalorder %s18, 0
      %p80 = por %p78, %p79
      %s82 = sadd.s32 %s81, 1
      %p85 = scmp.eq.s32.totalorder %s12, 1
      %p86 = scmp.ne.s32.totalorder %s81, %s83
      %p87 = scmp.eq.s32.totalorder %s12, 0
      %p88 = por %p86, %p87
      %p89 = scmp.ne.s32.totalorder %s81, %s83
      %p90 = scmp.eq.s32.totalorder %s17, 1
      %p91 = por %p89, %p90
      %p92 = scmp.ne.s32.totalorder %s83, %s84
      %p93 = scmp.eq.s32.totalorder %s17, 0
      %p94 = por %p92, %p93
      %p95 = scmp.ne.s32.totalorder %s83, %s84
      %p96 = scmp.eq.s32.totalorder %s18, 1
      %p97 = por %p95, %p96
      %p99 = scmp.ne.s32.totalorder %s84, %s98
      %p100 = scmp.eq.s32.totalorder %s18, 0
      %p101 = por %p99, %p100
      %s102 = ssub.s32 %s19, %s31
      %s103 = ssub.s32 %s20, %s27
      %s104 = sor.u32 %s102, %s103
      %p105 = scmp.eq.s32.totalorder %s104, 0
      %s107 = sadd.s32 %s106, 1
      %s108 = scalar_select %p105, %s106, %s107
      %p111 = pneg %p105
      %p112 = scmp.eq.s32.totalorder %s12, 1
      %p113 = por %p111, %p112
      %p114 = scmp.ne.s32.totalorder %s106, %s109
      %p115 = scmp.eq.s32.totalorder %s12, 0
      %p116 = por %p114, %p115
      %p117 = scmp.ne.s32.totalorder %s106, %s109
      %p118 = scmp.eq.s32.totalorder %s17, 1
      %p119 = por %p117, %p118
      %p120 = scmp.ne.s32.totalorder %s109, %s110
      %p121 = scmp.eq.s32.totalorder %s17, 0
      %p122 = por %p120, %p121
      %p123 = scmp.ne.s32.totalorder %s109, %s110
      %p124 = scmp.eq.s32.totalorder %s18, 1
      %p125 = por %p123, %p124
      %p127 = scmp.ne.s32.totalorder %s110, %s126
      %p128 = scmp.eq.s32.totalorder %s18, 0
      %p129 = por %p127, %p128
      %p130 = scmp.le.s32.totalorder 1, %s12
      %p131 = scmp.lt.s32.totalorder %s12, 3
      %p132 = pnand %p130, %p131
      %p133 = pneg %p132
      // Predicated region
      $region9: #{conv_layer_forward.1} parent=5 // pred_check
        _
      $region10: #{conv_layer_forward.1} parent=5 // pred_check_branch
        %135 = sbr.rel (%p132) target = $region12
      $region11: #{conv_layer_forward.1} parent=5 // pred_region
        %s136 = ssub.s32 %s12, 1
        // Predicated region
        $region13: #{conv_layer_forward.1} parent=11 // pred_check
          %p137 = pneg %p73
        $region14: #{conv_layer_forward.1} parent=11 // pred_check_branch
          %139 = sbr.rel (%p137) target = $region16
        $region15: #{conv_layer_forward.1} parent=11 // pred_region
          _
        $region16: #{conv_layer_forward.1} parent=11 // pred_fallthru
          _
        // Predicated region
        $region17: #{conv_layer_forward.1} parent=11 // pred_check
          %p140 = pneg %p94
        $region18: #{conv_layer_forward.1} parent=11 // pred_check_branch
          %142 = sbr.rel (%p140) target = $region20
        $region19: #{conv_layer_forward.1} parent=11 // pred_region
          _
        $region20: #{conv_layer_forward.1} parent=11 // pred_fallthru
          _
      $region12: #{conv_layer_forward.1} parent=5 // pred_fallthru
        _
      %p143 = scmp.lt.s32.totalorder %s12, 2
      // Predicated region
      $region21: #{conv_layer_forward.1} parent=5 // pred_check
        %p144 = pneg %p143
      $region22: #{conv_layer_forward.1} parent=5 // pred_check_branch
        %146 = sbr.rel (%p144) target = $region24
      $region23: #{conv_layer_forward.1} parent=5 // pred_region
        // Predicated region
        $region25: #{conv_layer_forward.1} parent=23 // pred_check
          %p147 = pneg %p46
        $region26: #{conv_layer_forward.1} parent=23 // pred_check_branch
          %149 = sbr.rel (%p147) target = $region28
        $region27: #{conv_layer_forward.1} parent=23 // pred_region
          %p150 = scmp.lt.s32.totalorder %s19, 1
          %s151 = scalar_select %p150, %s19, 1
          %p152 = scmp.lt.s32.totalorder %s20, 0
          %s153 = scalar_select %p152, %s20, 0
          %s154 = sadd.s32 %s153, %s151
          %s155 = smul.addr %s154, 4
          %s156 = scalar_lea.vmem %s0, %s155
        $region28: #{conv_layer_forward.1} parent=23 // pred_fallthru
          _
      $region24: #{conv_layer_forward.1} parent=5 // pred_fallthru
        _
      %p157 = scmp.le.s32.totalorder 1, %s12
      %p158 = scmp.lt.s32.totalorder %s12, 3
      %p159 = pnand %p157, %p158
      %p160 = pneg %p159
      // Predicated region
      $region29: #{conv_layer_forward.1} parent=5 // pred_check
        _
      $region30: #{conv_layer_forward.1} parent=5 // pred_check_branch
        %162 = sbr.rel (%p159) target = $region32
      $region31: #{conv_layer_forward.1} parent=5 // pred_region
        %s163 = ssub.s32 %s12, 1
        %p164 = scmp.lt.s32.totalorder %s21, 1
        %s165 = scalar_select %p164, %s21, 1
        %p166 = scmp.lt.s32.totalorder %s22, 0
        %s167 = scalar_select %p166, %s22, 0
        %s168 = sadd.s32 %s167, %s165
        %s169 = smul.addr %s168, 4
        %s170 = scalar_lea.vmem %s0, %s169
        %p171 = pneg %p52
        %p172 = pneg %p49
        %p173 = pneg %p73
        %p174 = pneg %p70
        %p175 = pneg %p94
        %p176 = pneg %p91
        %p177 = pneg %p122
        %p178 = pneg %p119
        %s179 = sand.u32 %s109, 1
        %s180 = scalar_lea.sflag [#allocation3], %s179
        %s181 = sand.u32 %s109, 1
        %s182 = smul.addr %s181, 8
        %s183 = scalar_lea.vmem [#allocation2], %s182
        %p184 = scmp.lt.s32.totalorder %s21, 1
        %s185 = scalar_select %p184, %s21, 1
        %p186 = scmp.lt.s32.totalorder %s22, 0
        %s187 = scalar_select %p186, %s22, 0
        %s188 = sadd.s32 %s187, %s185
        %s189 = smul.addr %s188, 4
        %s190 = scalar_lea.vmem %s0, %s189
        %v191 = vld [vmem:[%s190] sm:$0xf]
        %v192 = vld [vmem:[%s1] sm:$0xff]
        %v193 = vld [vmem:[%s1 + $0x8] sm:$0xff]
        %v194 = vld [vmem:[%s1 + $0x10] sm:$0xff]
        %196 = vrot.lane.b32.xlu0 %v191, 1
        %v197 = vpop.permute.xlu0 %196
        %vm199 = vcmask 7168
        %v200 = vsel %vm199, 0.0, %v197
        %vm201 = vcmask 31744
        %v203 = vsel %vm201, %v192, 0
        %vm205 = vcmask 1043456
        %v207 = vsel %vm205, %v200, 0
        %209 = vmatprep.subr.mxu0 0.0
        %210 = vmatpush1.msra.mxu0 0.0
        %211 = vmatprep.subr.mxu0 0.0
        %212 = vmatpush1.msra.mxu0 0.0
        %213 = vmatprep.subr.mxu0 0.0
        %214 = vmatpush1.msra.mxu0 0.0
        %215 = vmatprep.subr.mxu0 0.0
        %216 = vmatpush1.msra.mxu0 0.0
        %217 = vmatprep.subr.mxu0 0.0
        %218 = vmatpush1.msra.mxu0 0.0
        %219 = vmatprep.subr.mxu0 0.0
        %220 = vmatpush1.msra.mxu0 0.0
        %221 = vmatprep.subr.mxu0 0.0
        %222 = vmatpush1.msra.mxu0 0.0
        %223 = vmatprep.subr.mxu0 0.0
        %224 = vmatpush1.msra.mxu0 0.0
        %225 = vmatprep.subr.mxu0 0.0
        %226 = vmatpush1.msra.mxu0 0.0
        %227 = vmatprep.subr.mxu0 0.0
        %228 = vmatpush1.msra.mxu0 0.0
        %229 = vmatprep.subr.mxu0 0.0
        %230 = vmatpush1.msra.mxu0 0.0
        %231 = vmatprep.subr.mxu0 0.0
        %232 = vmatpush1.msra.mxu0 0.0
        %233 = vmatprep.subr.mxu0 0.0
        %234 = vmatpush1.msra.mxu0 0.0
        %235 = vmatprep.subr.mxu0 0.0
        %236 = vmatpush1.msra.mxu0 0.0
        %237 = vmatprep.subr.mxu0 0.0
        %238 = vmatpush1.msra.mxu0 0.0
        %239 = vmatprep.subr.mxu0 0.0
        %240 = vmatpush1.msra.mxu0 %v207
        %241 = vmatprep.subr.mxu0 0.0
        %242 = vmatpush2.msra.mxu0 0.0
        %243 = vmatprep.subr.mxu0 0.0
        %244 = vmatpush2.msra.mxu0 0.0
        %245 = vmatprep.subr.mxu0 0.0
        %246 = vmatpush2.msra.mxu0 0.0
        %247 = vmatprep.subr.mxu0 0.0
        %248 = vmatpush2.msra.mxu0 0.0
        %249 = vmatprep.subr.mxu0 0.0
        %250 = vmatpush2.msra.mxu0 0.0
        %251 = vmatprep.subr.mxu0 0.0
        %252 = vmatpush2.msra.mxu0 0.0
        %253 = vmatprep.subr.mxu0 0.0
        %254 = vmatpush2.msra.mxu0 0.0
        %255 = vmatprep.subr.mxu0 0.0
        %256 = vmatpush2.msra.mxu0 0.0
        %257 = vmatprep.subr.mxu0 0.0
        %258 = vmatpush2.msra.mxu0 0.0
        %259 = vmatprep.subr.mxu0 0.0
        %260 = vmatpush2.msra.mxu0 0.0
        %261 = vmatprep.subr.mxu0 0.0
        %262 = vmatpush2.msra.mxu0 0.0
        %263 = vmatprep.subr.mxu0 0.0
        %264 = vmatpush2.msra.mxu0 0.0
        %265 = vmatprep.subr.mxu0 0.0
        %266 = vmatpush2.msra.mxu0 0.0
        %267 = vmatprep.subr.mxu0 0.0
        %268 = vmatpush2.msra.mxu0 0.0
        %269 = vmatprep.subr.mxu0 0.0
        %270 = vmatpush2.msra.mxu0 0.0
        %271 = vmatprep.subr.mxu0 0.0
        %272 = vmatpush2.msra.mxu0 0.0
        %273 = vmatprep.mubr.f32.mxu0 0.0
        %274 = vmatmul.mubr.f32.gmra.mxu0 %v203
        %v275 = vpop.f32.mrf.mxu0
        %v276 = vadd.f32 0.0, %v275
        %v277 = vpop.f32.mrf.mxu0
        %278 = vdwg.mxu0
        %v280 = vsel %vm201, %v193, 0
        %v282 = vsel %vm205, %v191, 0
        %284 = vmatprep.subr.mxu0 0.0
        %285 = vmatpush1.msra.mxu0 0.0
        %286 = vmatprep.subr.mxu0 0.0
        %287 = vmatpush1.msra.mxu0 0.0
        %288 = vmatprep.subr.mxu0 0.0
        %289 = vmatpush1.msra.mxu0 0.0
        %290 = vmatprep.subr.mxu0 0.0
        %291 = vmatpush1.msra.mxu0 0.0
        %292 = vmatprep.subr.mxu0 0.0
        %293 = vmatpush1.msra.mxu0 0.0
        %294 = vmatprep.subr.mxu0 0.0
        %295 = vmatpush1.msra.mxu0 0.0
        %296 = vmatprep.subr.mxu0 0.0
        %297 = vmatpush1.msra.mxu0 0.0
        %298 = vmatprep.subr.mxu0 0.0
        %299 = vmatpush1.msra.mxu0 0.0
        %300 = vmatprep.subr.mxu0 0.0
        %301 = vmatpush1.msra.mxu0 0.0
        %302 = vmatprep.subr.mxu0 0.0
        %303 = vmatpush1.msra.mxu0 0.0
        %304 = vmatprep.subr.mxu0 0.0
        %305 = vmatpush1.msra.mxu0 0.0
        %306 = vmatprep.subr.mxu0 0.0
        %307 = vmatpush1.msra.mxu0 0.0
        %308 = vmatprep.subr.mxu0 0.0
        %309 = vmatpush1.msra.mxu0 0.0
        %310 = vmatprep.subr.mxu0 0.0
        %311 = vmatpush1.msra.mxu0 0.0
        %312 = vmatprep.subr.mxu0 0.0
        %313 = vmatpush1.msra.mxu0 0.0
        %314 = vmatprep.subr.mxu0 0.0
        %315 = vmatpush1.msra.mxu0 %v282
        %316 = vmatprep.subr.mxu0 0.0
        %317 = vmatpush2.msra.mxu0 0.0
        %318 = vmatprep.subr.mxu0 0.0
        %319 = vmatpush2.msra.mxu0 0.0
        %320 = vmatprep.subr.mxu0 0.0
        %321 = vmatpush2.msra.mxu0 0.0
        %322 = vmatprep.subr.mxu0 0.0
        %323 = vmatpush2.msra.mxu0 0.0
        %324 = vmatprep.subr.mxu0 0.0
        %325 = vmatpush2.msra.mxu0 0.0
        %326 = vmatprep.subr.mxu0 0.0
        %327 = vmatpush2.msra.mxu0 0.0
        %328 = vmatprep.subr.mxu0 0.0
        %329 = vmatpush2.msra.mxu0 0.0
        %330 = vmatprep.subr.mxu0 0.0
        %331 = vmatpush2.msra.mxu0 0.0
        %332 = vmatprep.subr.mxu0 0.0
        %333 = vmatpush2.msra.mxu0 0.0
        %334 = vmatprep.subr.mxu0 0.0
        %335 = vmatpush2.msra.mxu0 0.0
        %336 = vmatprep.subr.mxu0 0.0
        %337 = vmatpush2.msra.mxu0 0.0
        %338 = vmatprep.subr.mxu0 0.0
        %339 = vmatpush2.msra.mxu0 0.0
        %340 = vmatprep.subr.mxu0 0.0
        %341 = vmatpush2.msra.mxu0 0.0
        %342 = vmatprep.subr.mxu0 0.0
        %343 = vmatpush2.msra.mxu0 0.0
        %344 = vmatprep.subr.mxu0 0.0
        %345 = vmatpush2.msra.mxu0 0.0
        %346 = vmatprep.subr.mxu0 0.0
        %347 = vmatpush2.msra.mxu0 0.0
        %348 = vmatprep.mubr.f32.mxu0 0.0
        %349 = vmatmul.mubr.f32.gmra.mxu0 %v280
        %v350 = vpop.f32.mrf.mxu0
        %v351 = vadd.f32 %v276, %v350
        %v352 = vpop.f32.mrf.mxu0
        %353 = vdwg.mxu0
        %354 = vrot.lane.b32.xlu0 %v191, 127
        %v355 = vpop.permute.xlu0 %354
        %vm357 = vcmask 121856
        %v358 = vsel %vm357, %v355, 0.0
        %v360 = vsel %vm201, %v194, 0
        %v363 = vsel %vm205, %v358, 0
        %365 = vmatprep.subr.mxu0 0.0
        %366 = vmatpush1.msra.mxu0 0.0
        %367 = vmatprep.subr.mxu0 0.0
        %368 = vmatpush1.msra.mxu0 0.0
        %369 = vmatprep.subr.mxu0 0.0
        %370 = vmatpush1.msra.mxu0 0.0
        %371 = vmatprep.subr.mxu0 0.0
        %372 = vmatpush1.msra.mxu0 0.0
        %373 = vmatprep.subr.mxu0 0.0
        %374 = vmatpush1.msra.mxu0 0.0
        %375 = vmatprep.subr.mxu0 0.0
        %376 = vmatpush1.msra.mxu0 0.0
        %377 = vmatprep.subr.mxu0 0.0
        %378 = vmatpush1.msra.mxu0 0.0
        %379 = vmatprep.subr.mxu0 0.0
        %380 = vmatpush1.msra.mxu0 0.0
        %381 = vmatprep.subr.mxu0 0.0
        %382 = vmatpush1.msra.mxu0 0.0
        %383 = vmatprep.subr.mxu0 0.0
        %384 = vmatpush1.msra.mxu0 0.0
        %385 = vmatprep.subr.mxu0 0.0
        %386 = vmatpush1.msra.mxu0 0.0
        %387 = vmatprep.subr.mxu0 0.0
        %388 = vmatpush1.msra.mxu0 0.0
        %389 = vmatprep.subr.mxu0 0.0
        %390 = vmatpush1.msra.mxu0 0.0
        %391 = vmatprep.subr.mxu0 0.0
        %392 = vmatpush1.msra.mxu0 0.0
        %393 = vmatprep.subr.mxu0 0.0
        %394 = vmatpush1.msra.mxu0 0.0
        %395 = vmatprep.subr.mxu0 0.0
        %396 = vmatpush1.msra.mxu0 %v363
        %397 = vmatprep.subr.mxu0 0.0
        %398 = vmatpush2.msra.mxu0 0.0
        %399 = vmatprep.subr.mxu0 0.0
        %400 = vmatpush2.msra.mxu0 0.0
        %401 = vmatprep.subr.mxu0 0.0
        %402 = vmatpush2.msra.mxu0 0.0
        %403 = vmatprep.subr.mxu0 0.0
        %404 = vmatpush2.msra.mxu0 0.0
        %405 = vmatprep.subr.mxu0 0.0
        %406 = vmatpush2.msra.mxu0 0.0
        %407 = vmatprep.subr.mxu0 0.0
        %408 = vmatpush2.msra.mxu0 0.0
        %409 = vmatprep.subr.mxu0 0.0
        %410 = vmatpush2.msra.mxu0 0.0
        %411 = vmatprep.subr.mxu0 0.0
        %412 = vmatpush2.msra.mxu0 0.0
        %413 = vmatprep.subr.mxu0 0.0
        %414 = vmatpush2.msra.mxu0 0.0
        %415 = vmatprep.subr.mxu0 0.0
        %416 = vmatpush2.msra.mxu0 0.0
        %417 = vmatprep.subr.mxu0 0.0
        %418 = vmatpush2.msra.mxu0 0.0
        %419 = vmatprep.subr.mxu0 0.0
        %420 = vmatpush2.msra.mxu0 0.0
        %421 = vmatprep.subr.mxu0 0.0
        %422 = vmatpush2.msra.mxu0 0.0
        %423 = vmatprep.subr.mxu0 0.0
        %424 = vmatpush2.msra.mxu0 0.0
        %425 = vmatprep.subr.mxu0 0.0
        %426 = vmatpush2.msra.mxu0 0.0
        %427 = vmatprep.subr.mxu0 0.0
        %428 = vmatpush2.msra.mxu0 0.0
        %429 = vmatprep.mubr.f32.mxu0 0.0
        %430 = vmatmul.mubr.f32.gmra.mxu0 %v360
        %v431 = vpop.f32.mrf.mxu0
        %v432 = vadd.f32 0.0, %v431
        %v433 = vpop.f32.mrf.mxu0
        %434 = vdwg.mxu0
        %v435 = vadd.f32 %v351, %v432
        %v436 = vld [vmem:[%s2] sm:$0xff]
        %438 = vset.pattern.permute.xlu0 0
        %439 = vperm.xlu0 %438, %v436
        %v440 = vpop.permute.xlu0 %439
        %v442 = vadd.f32 %v435, %v440
        %v443 = vxor.u32 %v442, 2147483648
        %v444 = vmul.f32 %v443, 1.442695
        %v445 = vpow.pop %v444
        %v446 = vadd.f32 %v445, 1.0
        %v447 = vrcp.pop %v446
        %v448 = vmul.f32 1.0, %v447
        %v449 = vmul.f32 %v442, %v448
        %vm450 = vcmask 130048
        %451 = vst.msk [vmem:[%s183] sm:$0xff] %vm450, %v449
        %s452 = sand.u32 %s109, 1
        %s453 = scalar_lea.sflag [#allocation3], %s452
        %s454 = sand.u32 %s109, 1
        %s455 = smul.addr %s454, 8
        %s456 = scalar_lea.vmem [#allocation2], %s455
        // Predicated region
        $region33: #{conv_layer_forward.1} parent=31 // pred_check
          %p457 = pneg %p119
        $region34: #{conv_layer_forward.1} parent=31 // pred_check_branch
          %459 = sbr.rel (%p457) target = $region36
        $region35: #{conv_layer_forward.1} parent=31 // pred_region
          %s461 = ssub.s32 128, 128
          %462 = vsyncadd %s453, %s461
          %s463 = sadd.s32 %s22, %s21
          %s464 = smul.addr %s463, 128
          %s465 = scalar_lea.hbm %s3, %s464
          %s467 = sshll.u32 %s456, 4
          %s468 = int_to_ptr.vmem [resolvable:$true] %s467
          %470 = dma.vmem_to_hbm [thread:$0]  %s468, 128, %s465, %s453
        $region36: #{conv_layer_forward.1} parent=31 // pred_fallthru
          _
      $region32: #{conv_layer_forward.1} parent=5 // pred_fallthru
        _
      %p471 = scmp.le.s32.totalorder 2, %s12
      // Predicated region
      $region37: #{conv_layer_forward.1} parent=5 // pred_check
        %p472 = pneg %p471
      $region38: #{conv_layer_forward.1} parent=5 // pred_check_branch
        %474 = sbr.rel (%p472) target = $region40
      $region39: #{conv_layer_forward.1} parent=5 // pred_region
        %s475 = ssub.s32 %s12, 2
        // Predicated region
        $region41: #{conv_layer_forward.1} parent=39 // pred_check
          %p476 = pneg %p125
        $region42: #{conv_layer_forward.1} parent=39 // pred_check_branch
          %478 = sbr.rel (%p476) target = $region44
        $region43: #{conv_layer_forward.1} parent=39 // pred_region
          %s479 = sand.u32 %s110, 1
          %s480 = scalar_lea.sflag [#allocation3], %s479
          %s481 = sand.u32 %s110, 1
          %s482 = smul.addr %s481, 8
          %s483 = scalar_lea.vmem [#allocation2], %s482
          %484 = dma.done %s480, 128
        $region44: #{conv_layer_forward.1} parent=39 // pred_fallthru
          _
      $region40: #{conv_layer_forward.1} parent=5 // pred_fallthru
        _
    $region6: #{conv_layer_forward.1} parent=1 // loop_footer
      %s16 = sadd.s32 1, %s12
    $region7: #{conv_layer_forward.1} parent=1 // loop_footer_branch
      %11 = sbr.rel target = $region3
    $region8: #{conv_layer_forward.1} parent=1 // loop_exit
      _
    %485 = vsyncpa [#allocation3], 1
    %s486 = scalar_lea.sflag [#allocation3], 1
    %487 = vsyncpa %s486, 1

</llo_original>
